<compile_context>
chip_gen: v7x
topology: tpu7x:2x2x1
jax: 0.10.0
libtpu: 0.0.40
codegen_flags: <defaults>
</compile_context>

<pallas_src>
import jax
import jax.numpy as jnp
from jax.experimental import pallas as pl
from jax.experimental.pallas import tpu as pltpu

LANE_CANDIDATES = (1024, 512, 256, 128)   # lane-dense widths, multiples of 128


def _chip_kind() -> str:
    try:
        return jax.devices()[0].device_kind.lower()
    except Exception:
        return ""


def _is_v5e(kind: str) -> bool:
    return "v5" in kind


def _is_v7x(kind: str) -> bool:
    return "v7" in kind


def make_residual(fn):
    """Fused Pallas implementation of `lambda x: fn(x) + x`.

    `fn` must be a strictly per-element, JAX-traceable function (gelu, tanh,
    scale, ...). Anything with axis/spatial semantics (softmax, layernorm,
    conv, attention) cannot be fused under this flattened elementwise tiling.
    """
    # TODO(synk): non-elementwise wrapped fns (conv/norm/attention blocks) need
    # their own kernels; this fusion only covers the per-element case.

    @jax.jit
    def residual(x):
        if not jnp.issubdtype(x.dtype, jnp.floating):
            raise TypeError(
                "Residual Pallas kernel supports floating dtypes only, got "
                f"{x.dtype}")

        orig_shape = x.shape
        total = int(x.size)
        itemsize = jnp.dtype(x.dtype).itemsize
        kind = _chip_kind()

        # --- generation-specific budgets -------------------------------------
        if _is_v7x(kind) or kind == "":
            # v7x: 64 MiB physical VMEM per TC -> stay within 32 MiB scoped.
            target_tile_bytes = 4 << 20
            vmem_limit_bytes = 32 << 20
        else:
            # v5e / v6e: 128 MiB VMEM -> larger tiles, higher scoped limit.
            target_tile_bytes = 8 << 20
            vmem_limit_bytes = 64 << 20

        # --- compute dtype (gate the f32 upcast by generation) ---------------
        if x.dtype == jnp.float32 or _is_v5e(kind):
            compute_dtype = jnp.float32      # v5e has no bf16 VPU/EUP
        else:
            compute_dtype = x.dtype          # v6e/v7x: native bf16 compute

        # --- lane-dense 2D layout, avoiding jnp.pad whenever possible --------
        lane = next((l for l in LANE_CANDIDATES if total % l == 0), None)
        needs_pad = lane is None
        if needs_pad:
            lane = 128                       # rare fallback: pad tiny tail only

        rows = -(-total // lane)

        # --- tile size: big, multiple-of-8 rows, >= 2 steps when possible ----
        bytes_per_row = lane * itemsize
        max_tile_rows = max(8, (target_tile_bytes // bytes_per_row) // 8 * 8)
        if rows <= 8:
            tile_rows = rows                 # single block spanning full extent
        else:
            half = max(8, (rows // 2) // 8 * 8)   # aim for >= 2 grid steps
            tile_rows = min(max_tile_rows, half)

            # v7x: two TensorCores -> prefer an even number of grid steps.
            if _is_v7x(kind):
                steps = -(-rows // tile_rows)
                if steps > 1 and steps % 2 == 1:
                    alt = ((-(-rows // (steps + 1)) + 7) // 8) * 8
                    if alt >= 8 and (-(-rows // alt)) % 2 == 0:
                        tile_rows = alt

        grid_steps = -(-rows // tile_rows)   # partial last block handled by Pallas

        # --- prepare input slab (no copies on the common divisible path) -----
        if needs_pad:
            flat = x.reshape(-1)
            flat = jnp.pad(flat, (0, rows * lane - total))
            xf = flat.reshape(rows, lane)
        else:
            xf = x.reshape(rows, lane)

        def kernel(x_ref, o_ref):
            xv = x_ref[...].astype(compute_dtype)
            o_ref[...] = (fn(xv) + xv).astype(o_ref.dtype)

        # NOTE: no input_output_aliases — `x` is a non-donated jit argument, so
        # aliasing would only make XLA insert a defensive copy (net loss).
        out = pl.pallas_call(
            kernel,
            out_shape=jax.ShapeDtypeStruct((rows, lane), x.dtype),
            grid_spec=pltpu.PrefetchScalarGridSpec(
                num_scalar_prefetch=0,
                grid=(grid_steps,),
                in_specs=[pl.BlockSpec((tile_rows, lane), lambda i: (i, 0))],
                out_specs=pl.BlockSpec((tile_rows, lane), lambda i: (i, 0)),
            ),
            compiler_params=pltpu.CompilerParams(
                dimension_semantics=("parallel",),
                vmem_limit_bytes=vmem_limit_bytes,
            ),
            cost_estimate=pl.CostEstimate(
                flops=8 * total,               # a few VPU ops per element
                transcendentals=total,         # e.g. gelu/tanh -> ~1 EUP op/elem
                bytes_accessed=2 * total * itemsize,
            ),
        )(xf)

        if needs_pad:
            return out.reshape(-1)[:total].reshape(orig_shape)
        return out.reshape(orig_shape)

    return residual


if __name__ == "__main__":
    key = jax.random.PRNGKey(0)
    x = jax.random.normal(key, (2, 4, 16, 16), dtype=jnp.float32)

    # Example wrapped fn (elementwise, deterministic, no parameters).
    fn = jax.nn.gelu

    residual = make_residual(fn)
    out = residual(x)
    jax.block_until_ready(out)

    # Reference check against plain JAX: fn(x) + x
    ref = fn(x) + x
    assert out.shape == x.shape and out.dtype == x.dtype
    assert jnp.allclose(out, ref, atol=1e-5, rtol=1e-5), "mismatch vs reference"

    print("KERNEL_OK")
</pallas_src>

<mosaic_0001>
module attributes {stable_mosaic.version = 11 : i64} {
  func.func @kernel(%arg0: i32, %arg1: memref<2x1024xf32, #tpu.memory_space<vmem>>, %arg2: memref<2x1024xf32, #tpu.memory_space<vmem>>) attributes {dimension_semantics = [#tpu.dimension_semantics<parallel>], iteration_bounds = array<i64: 1>, scalar_prefetch = 0 : i64, scratch_operands = 0 : i64, tpu.core_type = #tpu.core_type<tc>, window_params = [{transform_indices = @transform_0, window_bounds = array<i64: 2, 1024>}, {transform_indices = @transform_1, window_bounds = array<i64: 2, 1024>}]} {
    %c0 = arith.constant 0 : index
    %c0_0 = arith.constant 0 : index
    %0 = vector.load %arg1[%c0, %c0_0] : memref<2x1024xf32, #tpu.memory_space<vmem>>, vector<2x1024xf32>
    %1 = arith.mulf %0, %0 : vector<2x1024xf32>
    %2 = arith.mulf %0, %1 : vector<2x1024xf32>
    %cst = arith.constant 4.471500e-02 : f32
    %3 = vector.broadcast %cst : f32 to vector<2x1024xf32>
    %4 = arith.mulf %3, %2 : vector<2x1024xf32>
    %5 = arith.addf %0, %4 : vector<2x1024xf32>
    %cst_1 = arith.constant 0.797884583 : f32
    %6 = vector.broadcast %cst_1 : f32 to vector<2x1024xf32>
    %7 = arith.mulf %6, %5 : vector<2x1024xf32>
    %8 = math.tanh %7 : vector<2x1024xf32>
    %cst_2 = arith.constant 1.000000e+00 : f32
    %9 = vector.broadcast %cst_2 : f32 to vector<2x1024xf32>
    %10 = arith.addf %9, %8 : vector<2x1024xf32>
    %cst_3 = arith.constant 5.000000e-01 : f32
    %11 = vector.broadcast %cst_3 : f32 to vector<2x1024xf32>
    %12 = arith.mulf %11, %10 : vector<2x1024xf32>
    %13 = arith.mulf %0, %12 : vector<2x1024xf32>
    %14 = arith.addf %13, %0 : vector<2x1024xf32>
    %c0_4 = arith.constant 0 : index
    %c0_5 = arith.constant 0 : index
    %15 = vector.load %arg2[%c0_4, %c0_5] : memref<2x1024xf32, #tpu.memory_space<vmem>>, vector<2x1024xf32>
    tpu.vector_store %arg2[%c0_4, %c0_5], %14 {strides = array<i32>} : memref<2x1024xf32, #tpu.memory_space<vmem>>, vector<2x1024xf32>,
    return
  }
  func.func @transform_0(%arg0: i32) -> (i32, i32) {
    %c0_i32 = arith.constant 0 : i32
    %c0_i32_0 = arith.constant 0 : i32
    return %arg0, %c0_i32 : i32, i32
  }
  func.func @transform_1(%arg0: i32) -> (i32, i32) {
    %c0_i32 = arith.constant 0 : i32
    %c0_i32_0 = arith.constant 0 : i32
    return %arg0, %c0_i32 : i32, i32
  }
}

</mosaic_0001>

<llo_original>
// kernel: residual.1
$region0: #{residual.1}
  #allocation0 [shape = 'u32[]', space=smem, size = 0x4, offset = 0x4, fixed_abs, tag = 'smem constant byte address 0x4 - core index']
  #allocation1 [shape = 'u32[144,128]{1,0:T(1,128)}', space=vmem, size = 0x12000, scoped, tag = 'internal scratch']
  %s0 = inlined_call_operand.hbm [shape: f32[2,1024], index: 0, kind: input, shape index: {}]
  %s1 = inlined_call_operand.hbm [shape: f32[2,1024], index: 1, kind: output, shape index: {}]
  %s2 = sld [smem:[#allocation0]]
  $region18: #{residual.1} parent=0
    _
  %s4 = ssub.s32 1, %s2
  %s5 = scalar_select 0, %s4, %s2
  $region1: #{residual.1} parent=0
    #allocation2 [shape = 'u8[8192]{0}', space=vmem, size = 0x2000, scoped, tag = 'input window, operand 0, single buffered']
    #allocation3 [shape = 's32[1]{0}', space=sflag, size = 0x4, scoped, tag = 'scoped memory for residual.1']
    #allocation4 [shape = 's32[1]{0}', space=sflag, size = 0x4, scoped, tag = 'scoped memory for residual.1']
    #allocation5 [shape = 'u8[8192]{0}', space=vmem, size = 0x2000, scoped, tag = 'output window, operand 0, single buffered']
    %6 = vsyncpa [#allocation3], 0
    %7 = vsyncpa [#allocation4], 0
    // Predicated region
    $region2: #{residual.1} parent=1 // pred_check
      _
    $region3: #{residual.1} parent=1 // pred_check_branch
      %9 = sbr.rel (0) target = $region5
    $region4: #{residual.1} parent=1 // pred_region
      %s11 = ssub.s32 256, 256
      %12 = vsyncadd [#allocation3], %s11
      %s14 = sshll.u32 [#allocation2], 4
      %s15 = int_to_ptr.vmem [resolvable:$true] %s14
      %17 = dma.hbm_to_vmem [thread:$0]  %s0, 256, %s15, [#allocation3]
    $region5: #{residual.1} parent=1 // pred_fallthru
      _
    // Predicated region
    $region6: #{residual.1} parent=1 // pred_check
      _
    $region7: #{residual.1} parent=1 // pred_check_branch
      %19 = sbr.rel (0) target = $region9
    $region8: #{residual.1} parent=1 // pred_region
      %20 = dma.done [#allocation3], 256
    $region9: #{residual.1} parent=1 // pred_fallthru
      _
    %v21 = vld [vmem:[#allocation2] sm:$0xff]
    %v22 = vld [vmem:[#allocation2 + $0x8] sm:$0xff]
    %v23 = vmul.f32 %v21, %v21
    %v24 = vmul.f32 %v22, %v22
    %v25 = vmul.f32 %v21, %v23
    %v26 = vmul.f32 %v22, %v24
    %v27 = vmul.f32 %v25, 0.044715
    %v28 = vmul.f32 %v26, 0.044715
    %v29 = vadd.f32 %v21, %v27
    %v30 = vadd.f32 %v22, %v28
    %v31 = vmul.f32 %v29, 0.7978846
    %v32 = vmul.f32 %v30, 0.7978846
    %v33 = vtanh.pop %v31
    %v34 = vtanh.pop %v32
    %v35 = vadd.f32 %v33, 1.0
    %v36 = vadd.f32 %v34, 1.0
    %v37 = vmul.f32 %v35, 0.5
    %v38 = vmul.f32 %v36, 0.5
    %v39 = vmul.f32 %v21, %v37
    %v40 = vmul.f32 %v22, %v38
    %v41 = vadd.f32 %v39, %v21
    %v42 = vadd.f32 %v40, %v22
    %43 = vst [vmem:[#allocation5] sm:$0xff] %v41
    %44 = vst [vmem:[#allocation5 + $0x8] sm:$0xff] %v42
    // Predicated region
    $region10: #{residual.1} parent=1 // pred_check
      _
    $region11: #{residual.1} parent=1 // pred_check_branch
      %46 = sbr.rel (0) target = $region13
    $region12: #{residual.1} parent=1 // pred_region
      %s48 = ssub.s32 256, 256
      %49 = vsyncadd [#allocation4], %s48
      %s51 = sshll.u32 [#allocation5], 4
      %s52 = int_to_ptr.vmem [resolvable:$true] %s51
      %54 = dma.vmem_to_hbm [thread:$0]  %s52, 256, %s1, [#allocation4]
    $region13: #{residual.1} parent=1 // pred_fallthru
      _
    // Predicated region
    $region14: #{residual.1} parent=1 // pred_check
      _
    $region15: #{residual.1} parent=1 // pred_check_branch
      %56 = sbr.rel (0) target = $region17
    $region16: #{residual.1} parent=1 // pred_region
      %57 = dma.done [#allocation4], 256
    $region17: #{residual.1} parent=1 // pred_fallthru
      _
    %58 = vsyncpa [#allocation3], 1
    %59 = vsyncpa [#allocation4], 1

</llo_original>
